<compile_context>
chip_gen: v6e
topology: v6e:2x2x1
jax: 0.10.0
libtpu: 0.0.40
codegen_flags: <defaults>
</compile_context>

<pallas_src>
import jax
import jax.numpy as jnp
from jax.experimental import pallas as pl
from jax.experimental.pallas import tpu as pltpu


def mlp_kernel(x_ref, w1_ref, b1_ref, w2_ref, b2_ref, o_ref):
    # Layer 1: Linear (bf16 MXU, f32 accumulate) + bias + ReLU (f32 VPU).
    x = x_ref[...].astype(jnp.bfloat16)            # in-vreg cast, no HBM cost
    h = jnp.dot(x, w1_ref[...], preferred_element_type=jnp.float32)
    h = jnp.maximum(h + b1_ref[...], 0.0)          # (1, H) broadcasts over rows
    # Layer 2: Linear (bf16 MXU, f32 accumulate) + bias.
    y = jnp.dot(h.astype(jnp.bfloat16), w2_ref[...],
                preferred_element_type=jnp.float32)
    o_ref[...] = (y + b2_ref[...]).astype(o_ref.dtype)


def _round_up(n, m):
    return ((n + m - 1) // m) * m


def prepare_params(w1, b1, w2, b2):
    """One-time parameter prep (call at init, NOT per forward).

    Casts matmul weights to bf16 (MXU-native on v5e/v6e/v7x, halves their
    DMA/VMEM footprint); biases stay f32 for the f32 VPU epilogue.
    """
    return (w1.astype(jnp.bfloat16), b1.astype(jnp.float32),
            w2.astype(jnp.bfloat16), b2.astype(jnp.float32))


def _choose_tile(b8, tm_max=512):
    """Batch tile: multiple of 8, >=2 tiles when possible (v7x megacore),
    capped so padding waste is <= tm-8 rows and VMEM use stays tiny."""
    if b8 <= 8:
        return b8
    return min(tm_max, _round_up(-(-b8 // 2), 8))


def neural_network_forward(x, params, *, tm_max=512):
    """Fused forward pass of the wrapped MLP.

    x:      (B, D_in)   float32 (or bf16)
    params: output of prepare_params():
            w1 (D_in, H) bf16, b1 (1, H) f32, w2 (H, D_out) bf16, b2 (1, D_out) f32
    returns (B, D_out) float32
    """
    w1, b1, w2, b2 = params
    B, D_in = x.shape
    H = w1.shape[1]
    D_out = w2.shape[1]

    # Pad batch only (to a multiple of 8, then of the tile); features unpadded.
    b8 = _round_up(B, 8)
    tm = _choose_tile(b8, tm_max)
    B_p = _round_up(b8, tm)
    xp = x if B_p == B else jnp.pad(x, ((0, B_p - B), (0, 0)))

    grid = (B_p // tm,)

    flops = 2 * B_p * (D_in * H + H * D_out)
    bytes_accessed = (
        B_p * D_in * xp.dtype.itemsize            # x streamed once
        + w1.size * w1.dtype.itemsize             # weights resident, read once
        + w2.size * w2.dtype.itemsize
        + b1.size * b1.dtype.itemsize
        + b2.size * b2.dtype.itemsize
        + B_p * D_out * 4                          # f32 output
    )

    out = pl.pallas_call(
        mlp_kernel,
        out_shape=jax.ShapeDtypeStruct((B_p, D_out), jnp.float32),  # explicit f32
        grid=grid,
        in_specs=[
            pl.BlockSpec((tm, D_in), lambda i: (i, 0)),     # x: tiled over batch
            pl.BlockSpec((D_in, H), lambda i: (0, 0)),      # w1: VMEM-resident
            pl.BlockSpec((1, H), lambda i: (0, 0)),         # b1: resident
            pl.BlockSpec((H, D_out), lambda i: (0, 0)),     # w2: resident
            pl.BlockSpec((1, D_out), lambda i: (0, 0)),     # b2: resident
        ],
        out_specs=pl.BlockSpec((tm, D_out), lambda i: (i, 0)),
        compiler_params=pltpu.CompilerParams(
            dimension_semantics=("parallel",),
        ),
        cost_estimate=pl.CostEstimate(
            flops=flops, transcendentals=0, bytes_accessed=bytes_accessed),
    )(xp, w1, b1, w2, b2)

    return out if B_p == B else out[:B]


def init_params(key, d_in=32, hidden=64, d_out=10):
    """Deterministic f32 parameter init (uniform like torch's default Linear)."""
    k1, k2, k3, k4 = jax.random.split(key, 4)
    lim1 = 1.0 / jnp.sqrt(d_in)
    lim2 = 1.0 / jnp.sqrt(hidden)
    w1 = jax.random.uniform(k1, (d_in, hidden), jnp.float32, -lim1, lim1)
    b1 = jax.random.uniform(k2, (1, hidden), jnp.float32, -lim1, lim1)
    w2 = jax.random.uniform(k3, (hidden, d_out), jnp.float32, -lim2, lim2)
    b2 = jax.random.uniform(k4, (1, d_out), jnp.float32, -lim2, lim2)
    return w1, b1, w2, b2


if __name__ == "__main__":
    key = jax.random.PRNGKey(0)
    k_x, k_p = jax.random.split(key)

    batch, d_in, hidden, d_out = 8, 32, 64, 10
    x = jax.random.normal(k_x, (batch, d_in), jnp.float32)
    w1, b1, w2, b2 = init_params(k_p, d_in, hidden, d_out)

    params = prepare_params(w1, b1, w2, b2)       # one-time bf16 weight cast
    out = neural_network_forward(x, params)
    out = jax.block_until_ready(out)
    assert out.shape == (batch, d_out)
    assert out.dtype == jnp.float32

    # Reference 1: pure-JAX emulation of the same bf16-input / f32-accumulate
    # pipeline -- should match the kernel essentially exactly.
    h_ref = jnp.dot(x.astype(jnp.bfloat16), params[0],
                    preferred_element_type=jnp.float32)
    h_ref = jnp.maximum(h_ref + params[1], 0.0)
    ref_bf16 = jnp.dot(h_ref.astype(jnp.bfloat16), params[2],
                       preferred_element_type=jnp.float32) + params[3]
    assert jnp.allclose(out, ref_bf16, atol=1e-4, rtol=1e-4)

    # Reference 2: full-f32 forward pass -- loose tolerance for the bf16 matmul
    # inputs (f32 accumulation keeps the error small at these depths).
    ref_f32 = jnp.maximum(x @ w1 + b1, 0.0) @ w2 + b2
    assert jnp.allclose(out, ref_f32, atol=1e-1, rtol=1e-1)

    print("KERNEL_OK")
</pallas_src>

<mosaic_0001>
module attributes {stable_mosaic.version = 11 : i64} {
  func.func @mlp_kernel(%arg0: i32, %arg1: memref<8x32xf32, #tpu.memory_space<vmem>>, %arg2: memref<32x64xbf16, #tpu.memory_space<vmem>>, %arg3: memref<1x64xf32, #tpu.memory_space<vmem>>, %arg4: memref<64x10xbf16, #tpu.memory_space<vmem>>, %arg5: memref<1x10xf32, #tpu.memory_space<vmem>>, %arg6: memref<8x10xf32, #tpu.memory_space<vmem>>) attributes {dimension_semantics = [#tpu.dimension_semantics<parallel>], iteration_bounds = array<i64: 1>, scalar_prefetch = 0 : i64, scratch_operands = 0 : i64, tpu.core_type = #tpu.core_type<tc>, window_params = [{transform_indices = @transform_0, window_bounds = array<i64: 8, 32>}, {pipeline_mode = #tpu.pipeline_mode<synchronous>, transform_indices = @transform_1, window_bounds = array<i64: 32, 64>}, {pipeline_mode = #tpu.pipeline_mode<synchronous>, transform_indices = @transform_2, window_bounds = array<i64: 1, 64>}, {pipeline_mode = #tpu.pipeline_mode<synchronous>, transform_indices = @transform_3, window_bounds = array<i64: 64, 10>}, {pipeline_mode = #tpu.pipeline_mode<synchronous>, transform_indices = @transform_4, window_bounds = array<i64: 1, 10>}, {transform_indices = @transform_5, window_bounds = array<i64: 8, 10>}]} {
    %c0 = arith.constant 0 : index
    %c0_0 = arith.constant 0 : index
    %0 = vector.load %arg1[%c0, %c0_0] : memref<8x32xf32, #tpu.memory_space<vmem>>, vector<8x32xf32>
    %1 = arith.truncf %0 : vector<8x32xf32> to vector<8x32xbf16>
    %c0_1 = arith.constant 0 : index
    %c0_2 = arith.constant 0 : index
    %2 = vector.load %arg2[%c0_1, %c0_2] : memref<32x64xbf16, #tpu.memory_space<vmem>>, vector<32x64xbf16>
    %cst = arith.constant dense<0.000000e+00> : vector<8x64xf32>
    %3 = tpu.matmul %1, %2, %cst {dimension_numbers = #tpu.dot_dimension_numbers<[1], [0], [0], [1], [0, 0, 1, 1], [], []>} : vector<8x32xbf16>, vector<32x64xbf16>, vector<8x64xf32> -> vector<8x64xf32>
    %c0_3 = arith.constant 0 : index
    %c0_4 = arith.constant 0 : index
    %4 = vector.load %arg3[%c0_3, %c0_4] : memref<1x64xf32, #tpu.memory_space<vmem>>, vector<1x64xf32>
    %5 = vector.broadcast %4 : vector<1x64xf32> to vector<8x64xf32>
    %6 = arith.addf %3, %5 : vector<8x64xf32>
    %cst_5 = arith.constant 0.000000e+00 : f32
    %7 = vector.broadcast %cst_5 : f32 to vector<8x64xf32>
    %8 = arith.maximumf %6, %7 : vector<8x64xf32>
    %9 = arith.truncf %8 : vector<8x64xf32> to vector<8x64xbf16>
    %c0_6 = arith.constant 0 : index
    %c0_7 = arith.constant 0 : index
    %10 = vector.load %arg4[%c0_6, %c0_7] : memref<64x10xbf16, #tpu.memory_space<vmem>>, vector<64x10xbf16>
    %cst_8 = arith.constant dense<0.000000e+00> : vector<8x10xf32>
    %11 = tpu.matmul %9, %10, %cst_8 {dimension_numbers = #tpu.dot_dimension_numbers<[1], [0], [0], [1], [0, 0, 1, 1], [], []>} : vector<8x64xbf16>, vector<64x10xbf16>, vector<8x10xf32> -> vector<8x10xf32>
    %c0_9 = arith.constant 0 : index
    %c0_10 = arith.constant 0 : index
    %12 = vector.load %arg5[%c0_9, %c0_10] : memref<1x10xf32, #tpu.memory_space<vmem>>, vector<1x10xf32>
    %13 = vector.broadcast %12 : vector<1x10xf32> to vector<8x10xf32>
    %14 = arith.addf %11, %13 : vector<8x10xf32>
    %c0_11 = arith.constant 0 : index
    %c0_12 = arith.constant 0 : index
    %15 = vector.load %arg6[%c0_11, %c0_12] : memref<8x10xf32, #tpu.memory_space<vmem>>, vector<8x10xf32>
    tpu.vector_store %arg6[%c0_11, %c0_12], %14 {strides = array<i32>} : memref<8x10xf32, #tpu.memory_space<vmem>>, vector<8x10xf32>,
    return
  }
  func.func @transform_0(%arg0: i32) -> (i32, i32) {
    %c0_i32 = arith.constant 0 : i32
    %c0_i32_0 = arith.constant 0 : i32
    return %arg0, %c0_i32 : i32, i32
  }
  func.func @transform_1(%arg0: i32) -> (i32, i32) {
    %c0_i32 = arith.constant 0 : i32
    %c0_i32_0 = arith.constant 0 : i32
    %c0_i32_1 = arith.constant 0 : i32
    return %c0_i32, %c0_i32_0 : i32, i32
  }
  func.func @transform_2(%arg0: i32) -> (i32, i32) {
    %c0_i32 = arith.constant 0 : i32
    %c0_i32_0 = arith.constant 0 : i32
    %c0_i32_1 = arith.constant 0 : i32
    return %c0_i32, %c0_i32_0 : i32, i32
  }
  func.func @transform_3(%arg0: i32) -> (i32, i32) {
    %c0_i32 = arith.constant 0 : i32
    %c0_i32_0 = arith.constant 0 : i32
    %c0_i32_1 = arith.constant 0 : i32
    return %c0_i32, %c0_i32_0 : i32, i32
  }
  func.func @transform_4(%arg0: i32) -> (i32, i32) {
    %c0_i32 = arith.constant 0 : i32
    %c0_i32_0 = arith.constant 0 : i32
    %c0_i32_1 = arith.constant 0 : i32
    return %c0_i32, %c0_i32_0 : i32, i32
  }
  func.func @transform_5(%arg0: i32) -> (i32, i32) {
    %c0_i32 = arith.constant 0 : i32
    %c0_i32_0 = arith.constant 0 : i32
    return %arg0, %c0_i32 : i32, i32
  }
}

</mosaic_0001>

<llo_original>
// kernel: tpu_custom_call.1
$region0: #{tpu_custom_call.1}
  #allocation0 [shape = 'u32[]', space=smem, size = 0x4, offset = 0x4, fixed_abs, tag = 'smem constant byte address 0x4 - core index']
  #allocation1 [shape = 'u32[144,128]{1,0:T(1,128)}', space=vmem, size = 0x12000, scoped, tag = 'internal scratch']
  %s0 = inlined_call_operand.vmem [shape: f32[8,32], index: 0, kind: input, shape index: {}]
  %s1 = inlined_call_operand.vmem [shape: bf16[32,64], index: 1, kind: input, shape index: {}]
  %s2 = inlined_call_operand.vmem [shape: f32[1,64], index: 2, kind: input, shape index: {}]
  %s3 = inlined_call_operand.vmem [shape: bf16[64,10], index: 3, kind: input, shape index: {}]
  %s4 = inlined_call_operand.vmem [shape: f32[1,10], index: 4, kind: input, shape index: {}]
  %s5 = inlined_call_operand.hbm [shape: f32[8,10], index: 5, kind: output, shape index: {}]
  %s6 = sld [smem:[#allocation0]]
  $region30: #{tpu_custom_call.1} parent=0
    _
  %s8 = ssub.s32 1, %s6
  %s9 = scalar_select 0, %s8, %s6
  $region1: #{tpu_custom_call.1} parent=0
    #allocation2 [shape = 'u8[4096]{0}', space=vmem, size = 0x1000, scoped, tag = 'output window, operand 0, single buffered']
    #allocation3 [shape = 's32[1]{0}', space=sflag, size = 0x4, scoped, tag = 'scoped memory for tpu_custom_call.1']
    %10 = vsyncpa [#allocation3], 0
    // Predicated region
    $region2: #{tpu_custom_call.1} parent=1 // pred_check
      _
    $region3: #{tpu_custom_call.1} parent=1 // pred_check_branch
      %12 = sbr.rel (0) target = $region5
    $region4: #{tpu_custom_call.1} parent=1 // pred_region
      _
    $region5: #{tpu_custom_call.1} parent=1 // pred_fallthru
      _
    // Predicated region
    $region6: #{tpu_custom_call.1} parent=1 // pred_check
      _
    $region7: #{tpu_custom_call.1} parent=1 // pred_check_branch
      %14 = sbr.rel (0) target = $region9
    $region8: #{tpu_custom_call.1} parent=1 // pred_region
      _
    $region9: #{tpu_custom_call.1} parent=1 // pred_fallthru
      _
    // Predicated region
    $region10: #{tpu_custom_call.1} parent=1 // pred_check
      _
    $region11: #{tpu_custom_call.1} parent=1 // pred_check_branch
      %16 = sbr.rel (0) target = $region13
    $region12: #{tpu_custom_call.1} parent=1 // pred_region
      _
    $region13: #{tpu_custom_call.1} parent=1 // pred_fallthru
      _
    // Predicated region
    $region14: #{tpu_custom_call.1} parent=1 // pred_check
      _
    $region15: #{tpu_custom_call.1} parent=1 // pred_check_branch
      %18 = sbr.rel (0) target = $region17
    $region16: #{tpu_custom_call.1} parent=1 // pred_region
      _
    $region17: #{tpu_custom_call.1} parent=1 // pred_fallthru
      _
    // Predicated region
    $region18: #{tpu_custom_call.1} parent=1 // pred_check
      _
    $region19: #{tpu_custom_call.1} parent=1 // pred_check_branch
      %20 = sbr.rel (0) target = $region21
    $region20: #{tpu_custom_call.1} parent=1 // pred_region
      _
    $region21: #{tpu_custom_call.1} parent=1 // pred_fallthru
      _
    %v22 = vld [vmem:[%s0] sm:$0xff]
    %v23 = vpack.c.bf16 %v22, %v22
    %v24 = vld [vmem:[%s1] sm:$0xf]
    %v25 = vld [vmem:[%s1 + $0x4] sm:$0xf]
    %v26 = vld [vmem:[%s1 + $0x8] sm:$0xf]
    %v27 = vld [vmem:[%s1 + $0xc] sm:$0xf]
    %v28 = vld [vmem:[%s2] sm:$0x1]
    %v30 = vlaneseq
    %v31 = vshrl.u32 %v30, 7
    %v32 = vsub.s32 0, %v31
    %v33 = vrot.slane %v28, %v32
    %v39 = vunpack.c.l.b16 %v24
    %v40 = vunpack.c.l.b16 %v25
    %v41 = vunpack.c.l.b16 %v26
    %v42 = vunpack.c.l.b16 %v27
    %v43 = vpack.c.b16 %v40, %v39
    %v44 = vpack.c.b16 %v42, %v41
    %vm47 = vcmask 261120
    %v49 = vsel %vm47, %v23, 0
    %51 = vmatprep.subr.bf16.mxu0 0
    %52 = vmatpush1.bf16.msra.mxu0 0
    %53 = vmatprep.subr.bf16.mxu0 0
    %54 = vmatpush1.bf16.msra.mxu0 0
    %55 = vmatprep.subr.bf16.mxu0 0
    %56 = vmatpush1.bf16.msra.mxu0 0
    %57 = vmatprep.subr.bf16.mxu0 0
    %58 = vmatpush1.bf16.msra.mxu0 0
    %59 = vmatprep.subr.bf16.mxu0 0
    %60 = vmatpush1.bf16.msra.mxu0 0
    %61 = vmatprep.subr.bf16.mxu0 0
    %62 = vmatpush1.bf16.msra.mxu0 0
    %63 = vmatprep.subr.bf16.mxu0 0
    %64 = vmatpush1.bf16.msra.mxu0 %v44
    %65 = vmatprep.subr.bf16.mxu0 0
    %66 = vmatpush1.bf16.msra.mxu0 %v43
    %67 = vmatprep.subr.bf16.mxu0 0
    %68 = vmatpush2.bf16.msra.mxu0 0
    %69 = vmatprep.subr.bf16.mxu0 0
    %70 = vmatpush2.bf16.msra.mxu0 0
    %71 = vmatprep.subr.bf16.mxu0 0
    %72 = vmatpush2.bf16.msra.mxu0 0
    %73 = vmatprep.subr.bf16.mxu0 0
    %74 = vmatpush2.bf16.msra.mxu0 0
    %75 = vmatprep.subr.bf16.mxu0 0
    %76 = vmatpush2.bf16.msra.mxu0 0
    %77 = vmatprep.subr.bf16.mxu0 0
    %78 = vmatpush2.bf16.msra.mxu0 0
    %79 = vmatprep.subr.bf16.mxu0 0
    %80 = vmatpush2.bf16.msra.mxu0 0
    %81 = vmatprep.subr.bf16.mxu0 0
    %82 = vmatpush2.bf16.msra.mxu0 0
    %83 = vmatprep.mubr.bf16.mxu0 0
    %84 = vmatmul.mubr.bf16.gmra.mxu0 %v49
    %v85 = vpop.f32.mrf.mxu0
    %v86 = vadd.f32 %v33, %v85
    %v87 = vpop.f32.mrf.mxu0
    %v88 = vpop.f32.mrf.mxu0
    %v89 = vpop.f32.mrf.mxu0
    %90 = vdwg.mxu0
    %v91 = vmax.f32 %v86, 0.0
    %v92 = vpack.c.bf16 %v91, %v91
    %v93 = vld [vmem:[%s3] sm:$0xf]
    %v94 = vld [vmem:[%s3 + $0x4] sm:$0xf]
    %v95 = vld [vmem:[%s3 + $0x8] sm:$0xf]
    %v96 = vld [vmem:[%s3 + $0xc] sm:$0xf]
    %v97 = vld [vmem:[%s3 + $0x10] sm:$0xf]
    %v98 = vld [vmem:[%s3 + $0x14] sm:$0xf]
    %v99 = vld [vmem:[%s3 + $0x18] sm:$0xf]
    %v100 = vld [vmem:[%s3 + $0x1c] sm:$0xf]
    %v101 = vld [vmem:[%s4] sm:$0x1]
    %v103 = vlaneseq
    %v104 = vshrl.u32 %v103, 7
    %v105 = vsub.s32 0, %v104
    %v106 = vrot.slane %v101, %v105
    %v116 = vunpack.c.l.b16 %v93
    %v117 = vunpack.c.l.b16 %v94
    %v118 = vunpack.c.l.b16 %v95
    %v119 = vunpack.c.l.b16 %v96
    %v120 = vunpack.c.l.b16 %v97
    %v121 = vunpack.c.l.b16 %v98
    %v122 = vunpack.c.l.b16 %v99
    %v123 = vunpack.c.l.b16 %v100
    %v124 = vpack.c.b16 %v117, %v116
    %v125 = vpack.c.b16 %v119, %v118
    %v126 = vpack.c.b16 %v121, %v120
    %v127 = vpack.c.b16 %v123, %v122
    %vm132 = vcmask 523264
    %v134 = vsel %vm132, %v92, 0
    %136 = vmatprep.subr.bf16.mxu0 0
    %137 = vmatpush1.bf16.msra.mxu0 0
    %138 = vmatprep.subr.bf16.mxu0 0
    %139 = vmatpush1.bf16.msra.mxu0 0
    %140 = vmatprep.subr.bf16.mxu0 0
    %141 = vmatpush1.bf16.msra.mxu0 0
    %142 = vmatprep.subr.bf16.mxu0 0
    %143 = vmatpush1.bf16.msra.mxu0 0
    %144 = vmatprep.subr.bf16.mxu0 0
    %145 = vmatpush1.bf16.msra.mxu0 %v127
    %146 = vmatprep.subr.bf16.mxu0 0
    %147 = vmatpush1.bf16.msra.mxu0 %v126
    %148 = vmatprep.subr.bf16.mxu0 0
    %149 = vmatpush1.bf16.msra.mxu0 %v125
    %150 = vmatprep.subr.bf16.mxu0 0
    %151 = vmatpush1.bf16.msra.mxu0 %v124
    %152 = vmatprep.subr.bf16.mxu0 0
    %153 = vmatpush2.bf16.msra.mxu0 0
    %154 = vmatprep.subr.bf16.mxu0 0
    %155 = vmatpush2.bf16.msra.mxu0 0
    %156 = vmatprep.subr.bf16.mxu0 0
    %157 = vmatpush2.bf16.msra.mxu0 0
    %158 = vmatprep.subr.bf16.mxu0 0
    %159 = vmatpush2.bf16.msra.mxu0 0
    %160 = vmatprep.subr.bf16.mxu0 0
    %161 = vmatpush2.bf16.msra.mxu0 0
    %162 = vmatprep.subr.bf16.mxu0 0
    %163 = vmatpush2.bf16.msra.mxu0 0
    %164 = vmatprep.subr.bf16.mxu0 0
    %165 = vmatpush2.bf16.msra.mxu0 0
    %166 = vmatprep.subr.bf16.mxu0 0
    %167 = vmatpush2.bf16.msra.mxu0 0
    %168 = vmatprep.mubr.bf16.mxu0 0
    %169 = vmatmul.mubr.bf16.gmra.mxu0 %v134
    %v170 = vpop.f32.mrf.mxu0
    %v171 = vadd.f32 %v106, %v170
    %v172 = vpop.f32.mrf.mxu0
    %v173 = vpop.f32.mrf.mxu0
    %v174 = vpop.f32.mrf.mxu0
    %175 = vdwg.mxu0
    %vm176 = vcmask 80896
    %177 = vst.msk [vmem:[#allocation2] sm:$0xff] %vm176, %v171
    // Predicated region
    $region22: #{tpu_custom_call.1} parent=1 // pred_check
      _
    $region23: #{tpu_custom_call.1} parent=1 // pred_check_branch
      %179 = sbr.rel (0) target = $region25
    $region24: #{tpu_custom_call.1} parent=1 // pred_region
      %s181 = ssub.s32 128, 128
      %182 = vsyncadd [#allocation3], %s181
      %s184 = sshll.u32 [#allocation2], 4
      %s185 = int_to_ptr.vmem [resolvable:$true] %s184
      %187 = dma.vmem_to_hbm [thread:$0]  %s185, 128, %s5, [#allocation3]
    $region25: #{tpu_custom_call.1} parent=1 // pred_fallthru
      _
    // Predicated region
    $region26: #{tpu_custom_call.1} parent=1 // pred_check
      _
    $region27: #{tpu_custom_call.1} parent=1 // pred_check_branch
      %189 = sbr.rel (0) target = $region29
    $region28: #{tpu_custom_call.1} parent=1 // pred_region
      %190 = dma.done [#allocation3], 128
    $region29: #{tpu_custom_call.1} parent=1 // pred_fallthru
      _
    %191 = vsyncpa [#allocation3], 1

</llo_original>
